<compile_context>
chip_gen: v7x
topology: tpu7x:2x2x1
jax: 0.10.0
libtpu: 0.0.40
codegen_flags: <defaults>
</compile_context>

<pallas_src>
import jax
import jax.numpy as jnp
from jax import lax
from jax.experimental import pallas as pl
from jax.experimental.pallas import tpu as pltpu

_MAX_TILE_BYTES = 2 * 1024 * 1024        # per-input block; x2 inputs x2 buffers = 8 MiB
_CHUNK_CANDIDATES = (512, 256, 128, 64)  # rows per in-kernel strip


def _round_up(a, m):
    return -(-a // m) * m


def _detect_cores():
    """Returns (#TensorCores one Pallas grid axis can shard over, dim semantics)."""
    try:
        kind = jax.devices()[0].device_kind.lower()
    except Exception:
        return 1, ("arbitrary", "arbitrary")
    if "v7" in kind:
        cp = getattr(pltpu, "CORE_PARALLEL", None)
        if cp is not None:
            return 2, (cp, getattr(pltpu, "ARBITRARY", "arbitrary"))
        return 2, ("parallel", "arbitrary")
    if ("lite" in kind) or ("v5e" in kind) or ("v6" in kind):
        return 1, ("arbitrary", "arbitrary")       # single TensorCore (v5e / v6e)
    if ("v4" in kind) or ("v5p" in kind) or ("v5" in kind):
        return 2, ("parallel", "arbitrary")         # megacore
    return 1, ("arbitrary", "arbitrary")


def _make_bce_kernel(rows, tblk, steps, chunk, mask_needed):
    nchunks = tblk // chunk

    def kernel(y_ref, x_ref, out_ref):
        c = pl.program_id(0)
        i = pl.program_id(1)

        @pl.when(i == 0)
        def _init():
            out_ref[...] = jnp.zeros_like(out_ref)

        # Intended (unclamped) first row of this grid step — only used for the
        # validity mask; the DMA block index is clamped in the index_map.
        blk_row0 = (c * steps + i) * tblk

        def strip(j, carry):
            if isinstance(j, int):
                off = j * chunk
            else:
                off = pl.multiple_of(j * chunk, chunk)
            # Upcast AFTER load so HBM traffic stays in the input's native dtype.
            y = y_ref[pl.ds(off, chunk), :].astype(jnp.float32)
            x = x_ref[pl.ds(off, chunk), :].astype(jnp.float32)
            if mask_needed:
                rid = blk_row0 + off + lax.broadcasted_iota(
                    jnp.int32, (chunk, 128), 0)
                valid = rid < rows
                # Fill y = x = 1 BEFORE the logs: the masked rows contribute
                # exactly 0 and garbage in out-of-range rows can never NaN.
                y = jnp.where(valid, y, 1.0)
                x = jnp.where(valid, x, 1.0)
            log_y = jnp.maximum(jnp.log(y), -100.0)        # PyTorch clamps at -100
            log_1my = jnp.maximum(jnp.log(1.0 - y), -100.0)
            # x*log(y) + (1-x)*log(1-y) == x*(log_y - log_1my) + log_1my
            t = x * (log_y - log_1my) + log_1my
            # Fold the strip into the (8,128) accumulator with vreg adds only;
            # the single cross-lane reduce happens once, in the wrapper.
            out_ref[...] += t.reshape(chunk // 8, 8, 128).sum(axis=0)
            return carry

        if nchunks == 1:
            strip(0, 0)
        else:
            lax.fori_loop(0, nchunks, strip, 0)

    return kernel


def _bce_partial_sums(y2d, x2d, rows, ncores, sems):
    """Stream the (rows,128) slabs; return (ncores*8,128) f32 partial sums of
    x*log(y) + (1-x)*log(1-y)  (un-negated)."""
    itemsize = max(jnp.dtype(y2d.dtype).itemsize, jnp.dtype(x2d.dtype).itemsize)
    max_rows = max(8, (_MAX_TILE_BYTES // (128 * itemsize)) // 8 * 8)

    rows_per_core = -(-rows // ncores)
    # tblk never exceeds the array's row extent (rows >= 8 is guaranteed by the
    # caller), so every block start is in bounds; only the trailing block may
    # be partial, which the in-kernel mask handles.
    tblk = min(max_rows, _round_up(rows_per_core, 8), (rows // 8) * 8)
    nblocks = -(-rows // tblk)
    steps = -(-nblocks // ncores)

    chunk = tblk
    for cand in _CHUNK_CANDIDATES:
        if tblk % cand == 0:
            chunk = cand
            break

    mask_needed = (ncores * steps * tblk) != rows
    last_block = nblocks - 1

    def row_map(c, i):
        # Clamp so over-coverage steps (nblocks % ncores != 0, partial trailing
        # block) re-read an in-bounds block; their contribution is masked to 0.
        return (jnp.minimum(c * steps + i, last_block), 0)

    tile_bytes = tblk * 128 * itemsize
    vmem_limit = int(min(64 * 1024 * 1024,
                         max(16 * 1024 * 1024, 4 * tile_bytes + 8 * 1024 * 1024)))

    kernel = _make_bce_kernel(rows, tblk, steps, chunk, mask_needed)
    return pl.pallas_call(
        kernel,
        out_shape=jax.ShapeDtypeStruct((ncores * 8, 128), jnp.float32),
        grid_spec=pltpu.PrefetchScalarGridSpec(
            num_scalar_prefetch=0,
            grid=(ncores, steps),
            in_specs=[
                pl.BlockSpec((tblk, 128), row_map),
                pl.BlockSpec((tblk, 128), row_map),
            ],
            out_specs=pl.BlockSpec((8, 128), lambda c, i: (c, 0)),
        ),
        compiler_params=pltpu.CompilerParams(
            dimension_semantics=sems,
            vmem_limit_bytes=vmem_limit),
    )(y2d, x2d)


def vae_loss(y, x, mu, log_sigma):
    n = int(y.size)
    assert int(x.size) == n

    # KL on the tiny (B, Z) latents stays in XLA (matches the reference module
    # literally: 0.5 * sum(exp(log_sigma) + mu^2 - 1 - log_sigma)).
    mu32 = mu.astype(jnp.float32)
    ls32 = log_sigma.astype(jnp.float32)
    kl = 0.5 * jnp.sum(jnp.exp(ls32) + mu32 * mu32 - 1.0 - ls32)

    rows = n // 128
    use_kernel = rows >= 8
    n_main = rows * 128 if use_kernel else 0

    bce = jnp.float32(0.0)

    if n_main < n:
        # Ragged flat tail (numel % 128 != 0) or an entirely tiny input:
        # fold it in with plain XLA ops (< 1 KiB of data).
        yt = y.reshape(-1)[n_main:].astype(jnp.float32)
        xt = x.reshape(-1)[n_main:].astype(jnp.float32)
        lt = jnp.maximum(jnp.log(yt), -100.0)
        l1 = jnp.maximum(jnp.log(1.0 - yt), -100.0)
        bce = bce - jnp.sum(xt * lt + (1.0 - xt) * l1)

    if use_kernel:
        if n_main < n:
            # TODO(synk): this prefix slice costs one HBM copy; a fully
            # copy-free ragged path would need a 1-D BlockSpec over the flat
            # buffer.  Only taken when numel % 128 != 0.
            y2d = y.reshape(-1)[:n_main].reshape(rows, 128)
            x2d = x.reshape(-1)[:n_main].reshape(rows, 128)
        else:
            y2d = y.reshape(rows, 128)   # free reshape, native dtype, no pad
            x2d = x.reshape(rows, 128)

        ncores, sems = _detect_cores()
        if rows < 8 * ncores:            # tiny input: one core is enough
            ncores, sems = 1, ("arbitrary", "arbitrary")

        if ncores > 1:
            try:
                part = _bce_partial_sums(y2d, x2d, rows, ncores, sems)
                if not isinstance(part, jax.core.Tracer):
                    jax.block_until_ready(part)
            except Exception:
                # Conservative fallback: serial single-core grid.
                part = _bce_partial_sums(y2d, x2d, rows, 1,
                                         ("arbitrary", "arbitrary"))
        else:
            part = _bce_partial_sums(y2d, x2d, rows, ncores, sems)

        bce = bce - jnp.sum(part)

    return bce + kl


if __name__ == "__main__":
    key = jax.random.PRNGKey(0)
    k1, k2, k3, k4 = jax.random.split(key, 4)

    B, C, H, W = 2, 4, 16, 16   # reconstruction / target images
    Z = 32                      # latent dim

    # y (decoder output) must be in (0, 1); x (target) in [0, 1].
    y = jax.nn.sigmoid(jax.random.normal(k1, (B, C, H, W), dtype=jnp.float32))
    x = jax.random.uniform(k2, (B, C, H, W), dtype=jnp.float32)
    mu = jax.random.normal(k3, (B, Z), dtype=jnp.float32)
    log_sigma = jax.random.normal(k4, (B, Z), dtype=jnp.float32)

    loss = vae_loss(y, x, mu, log_sigma)
    jax.block_until_ready(loss)

    # Pure-JAX reference check (loose tolerance; f32 summation-order noise only).
    ref_bce = -jnp.sum(x * jnp.maximum(jnp.log(y), -100.0)
                       + (1.0 - x) * jnp.maximum(jnp.log(1.0 - y), -100.0))
    ref_kl = 0.5 * jnp.sum(jnp.exp(log_sigma) + mu * mu - 1.0 - log_sigma)
    ref = ref_bce + ref_kl
    assert jnp.allclose(loss, ref, rtol=1e-4, atol=1e-2), (loss, ref)

    print("KERNEL_OK")
</pallas_src>

<mosaic_0001>
module attributes {stable_mosaic.version = 11 : i64} {
  func.func @kernel(%arg0: i32, %arg1: i32, %arg2: memref<16x128xf32, #tpu.memory_space<vmem>>, %arg3: memref<16x128xf32, #tpu.memory_space<vmem>>, %arg4: memref<8x128xf32, #tpu.memory_space<vmem>>) attributes {dimension_semantics = [#tpu.dimension_semantics<arbitrary>, #tpu.dimension_semantics<arbitrary>], iteration_bounds = array<i64: 1, 1>, scalar_prefetch = 0 : i64, scratch_operands = 0 : i64, tpu.core_type = #tpu.core_type<tc>, window_params = [{transform_indices = @transform_0, window_bounds = array<i64: 16, 128>}, {transform_indices = @transform_1, window_bounds = array<i64: 16, 128>}, {transform_indices = @transform_2, window_bounds = array<i64: 8, 128>}]} {
    %c0_i32 = arith.constant 0 : i32
    %0 = arith.cmpi eq, %arg1, %c0_i32 : i32
    %1 = arith.extui %0 : i1 to i32
    %c0_i32_0 = arith.constant 0 : i32
    %2 = arith.cmpi ne, %1, %c0_i32_0 : i32
    scf.if %2 {
      %cst_11 = arith.constant 0.000000e+00 : f32
      %21 = vector.broadcast %cst_11 : f32 to vector<8x128xf32>
      %c0_12 = arith.constant 0 : index
      %c0_13 = arith.constant 0 : index
      %22 = vector.load %arg4[%c0_12, %c0_13] : memref<8x128xf32, #tpu.memory_space<vmem>>, vector<8x128xf32>
      tpu.vector_store %arg4[%c0_12, %c0_13], %21 {strides = array<i32>} : memref<8x128xf32, #tpu.memory_space<vmem>>, vector<8x128xf32>,
    } else {
    }
    %c0 = arith.constant 0 : index
    %c0_1 = arith.constant 0 : index
    %3 = vector.load %arg2[%c0, %c0_1] : memref<16x128xf32, #tpu.memory_space<vmem>>, vector<16x128xf32>
    %c0_2 = arith.constant 0 : index
    %c0_3 = arith.constant 0 : index
    %4 = vector.load %arg3[%c0_2, %c0_3] : memref<16x128xf32, #tpu.memory_space<vmem>>, vector<16x128xf32>
    %5 = math.log %3 : vector<16x128xf32>
    %cst = arith.constant -1.000000e+02 : f32
    %6 = vector.broadcast %cst : f32 to vector<16x128xf32>
    %7 = arith.maximumf %5, %6 : vector<16x128xf32>
    %cst_4 = arith.constant 1.000000e+00 : f32
    %8 = vector.broadcast %cst_4 : f32 to vector<16x128xf32>
    %9 = arith.subf %8, %3 : vector<16x128xf32>
    %10 = math.log %9 : vector<16x128xf32>
    %cst_5 = arith.constant -1.000000e+02 : f32
    %11 = vector.broadcast %cst_5 : f32 to vector<16x128xf32>
    %12 = arith.maximumf %10, %11 : vector<16x128xf32>
    %13 = arith.subf %7, %12 : vector<16x128xf32>
    %14 = arith.mulf %4, %13 : vector<16x128xf32>
    %15 = arith.addf %14, %12 : vector<16x128xf32>
    %c0_6 = arith.constant 0 : index
    %c0_7 = arith.constant 0 : index
    %16 = vector.load %arg4[%c0_6, %c0_7] : memref<8x128xf32, #tpu.memory_space<vmem>>, vector<8x128xf32>
    %17 = vector.shape_cast %15 : vector<16x128xf32> to vector<2x8x128xf32>
    %cst_8 = arith.constant dense<0.000000e+00> : vector<8x128xf32>
    %18 = vector.multi_reduction <add>, %17, %cst_8 [0] : vector<2x8x128xf32> to vector<8x128xf32>
    %19 = arith.addf %16, %18 : vector<8x128xf32>
    %c0_9 = arith.constant 0 : index
    %c0_10 = arith.constant 0 : index
    %20 = vector.load %arg4[%c0_9, %c0_10] : memref<8x128xf32, #tpu.memory_space<vmem>>, vector<8x128xf32>
    tpu.vector_store %arg4[%c0_9, %c0_10], %19 {strides = array<i32>} : memref<8x128xf32, #tpu.memory_space<vmem>>, vector<8x128xf32>,
    return
  }
  func.func @transform_0(%arg0: i32, %arg1: i32) -> (i32, i32) {
    %c1_i32 = arith.constant 1 : i32
    %0 = arith.muli %arg0, %c1_i32 : i32
    %1 = arith.addi %0, %arg1 : i32
    %c0_i32 = arith.constant 0 : i32
    %2 = arith.minsi %1, %c0_i32 : i32
    %c0_i32_0 = arith.constant 0 : i32
    %c0_i32_1 = arith.constant 0 : i32
    return %2, %c0_i32_0 : i32, i32
  }
  func.func @transform_1(%arg0: i32, %arg1: i32) -> (i32, i32) {
    %c1_i32 = arith.constant 1 : i32
    %0 = arith.muli %arg0, %c1_i32 : i32
    %1 = arith.addi %0, %arg1 : i32
    %c0_i32 = arith.constant 0 : i32
    %2 = arith.minsi %1, %c0_i32 : i32
    %c0_i32_0 = arith.constant 0 : i32
    %c0_i32_1 = arith.constant 0 : i32
    return %2, %c0_i32_0 : i32, i32
  }
  func.func @transform_2(%arg0: i32, %arg1: i32) -> (i32, i32) {
    %c0_i32 = arith.constant 0 : i32
    %c0_i32_0 = arith.constant 0 : i32
    return %arg0, %c0_i32 : i32, i32
  }
}

</mosaic_0001>

<llo_original>
// kernel: tpu_custom_call.1
$region0: #{tpu_custom_call.1}
  #allocation0 [shape = 'u32[]', space=smem, size = 0x4, offset = 0x4, fixed_abs, tag = 'smem constant byte address 0x4 - core index']
  #allocation1 [shape = 'u32[144,128]{1,0:T(1,128)}', space=vmem, size = 0x12000, scoped, tag = 'internal scratch']
  %s0 = inlined_call_operand.hbm [shape: f32[16,128], index: 0, kind: input, shape index: {}]
  %s1 = inlined_call_operand.hbm [shape: f32[16,128], index: 1, kind: input, shape index: {}]
  %s2 = inlined_call_operand.hbm [shape: f32[8,128], index: 2, kind: output, shape index: {}]
  %s3 = sld [smem:[#allocation0]]
  $region30: #{tpu_custom_call.1} parent=0
    _
  %s5 = ssub.s32 1, %s3
  %s6 = scalar_select 0, %s5, %s3
  $region1: #{tpu_custom_call.1} parent=0
    #allocation2 [shape = 'u8[8192]{0}', space=vmem, size = 0x2000, scoped, tag = 'input window, operand 0, single buffered']
    #allocation3 [shape = 's32[1]{0}', space=sflag, size = 0x4, scoped, tag = 'scoped memory for tpu_custom_call.1']
    #allocation4 [shape = 's32[1]{0}', space=sflag, size = 0x4, scoped, tag = 'scoped memory for tpu_custom_call.1']
    #allocation5 [shape = 'u8[8192]{0}', space=vmem, size = 0x2000, scoped, tag = 'input window, operand 1, single buffered']
    #allocation6 [shape = 's32[1]{0}', space=sflag, size = 0x4, scoped, tag = 'scoped memory for tpu_custom_call.1']
    #allocation7 [shape = 'u8[4096]{0}', space=vmem, size = 0x1000, scoped, tag = 'output window, operand 0, single buffered']
    %7 = vsyncpa [#allocation3], 0
    %8 = vsyncpa [#allocation6], 0
    %9 = vsyncpa [#allocation4], 0
    // Predicated region
    $region2: #{tpu_custom_call.1} parent=1 // pred_check
      _
    $region3: #{tpu_custom_call.1} parent=1 // pred_check_branch
      %11 = sbr.rel (0) target = $region5
    $region4: #{tpu_custom_call.1} parent=1 // pred_region
      %s12 = sadd.s32 0, 0
      %p13 = scmp.lt.s32.totalorder %s12, 0
      %s14 = scalar_select %p13, %s12, 0
      %s15 = smul.u32 2, %s14
      %s17 = ssub.s32 256, 256
      %18 = vsyncadd [#allocation3], %s17
      %s19 = smul.addr %s15, 128
      %s20 = scalar_lea.hbm %s0, %s19
      %s21 = sshll.u32 [#allocation2], 4
      %s22 = int_to_ptr.vmem [resolvable:$true] %s21
      %27 = dma.hbm_to_vmem [thread:$0]  %s20, 256, %s22, [#allocation3], 128, 128, 8
    $region5: #{tpu_custom_call.1} parent=1 // pred_fallthru
      _
    // Predicated region
    $region6: #{tpu_custom_call.1} parent=1 // pred_check
      _
    $region7: #{tpu_custom_call.1} parent=1 // pred_check_branch
      %29 = sbr.rel (0) target = $region9
    $region8: #{tpu_custom_call.1} parent=1 // pred_region
      %s30 = sadd.s32 0, 0
      %p31 = scmp.lt.s32.totalorder %s30, 0
      %s32 = scalar_select %p31, %s30, 0
      %s33 = smul.u32 2, %s32
      %s35 = ssub.s32 256, 256
      %36 = vsyncadd [#allocation6], %s35
      %s37 = smul.addr %s33, 128
      %s38 = scalar_lea.hbm %s1, %s37
      %s39 = sshll.u32 [#allocation5], 4
      %s40 = int_to_ptr.vmem [resolvable:$true] %s39
      %45 = dma.hbm_to_vmem [thread:$0]  %s38, 256, %s40, [#allocation6], 128, 128, 8
    $region9: #{tpu_custom_call.1} parent=1 // pred_fallthru
      _
    // Predicated region
    $region10: #{tpu_custom_call.1} parent=1 // pred_check
      _
    $region11: #{tpu_custom_call.1} parent=1 // pred_check_branch
      %47 = sbr.rel (0) target = $region13
    $region12: #{tpu_custom_call.1} parent=1 // pred_region
      %48 = dma.done [#allocation3], 256
    $region13: #{tpu_custom_call.1} parent=1 // pred_fallthru
      _
    // Predicated region
    $region14: #{tpu_custom_call.1} parent=1 // pred_check
      _
    $region15: #{tpu_custom_call.1} parent=1 // pred_check_branch
      %50 = sbr.rel (0) target = $region17
    $region16: #{tpu_custom_call.1} parent=1 // pred_region
      %51 = dma.done [#allocation6], 256
    $region17: #{tpu_custom_call.1} parent=1 // pred_fallthru
      _
    %s52 = sadd.s32 0, 0
    %p53 = scmp.lt.s32.totalorder %s52, 0
    %s54 = scalar_select %p53, %s52, 0
    %s55 = smul.u32 2, %s54
    %s56 = sadd.s32 0, 0
    %p57 = scmp.lt.s32.totalorder %s56, 0
    %s58 = scalar_select %p57, %s56, 0
    %s59 = smul.u32 2, %s58
    %p60 = scmp.eq.s32.totalorder 0, 0
    // Predicated region
    $region18: #{tpu_custom_call.1} parent=1 // pred_check
      %p61 = pneg %p60
    $region19: #{tpu_custom_call.1} parent=1 // pred_check_branch
      %63 = sbr.rel (%p61) target = $region21
    $region20: #{tpu_custom_call.1} parent=1 // pred_region
      %64 = vst [vmem:[#allocation7] sm:$0xff] 0.0
    $region21: #{tpu_custom_call.1} parent=1 // pred_fallthru
      _
    %v65 = vld [vmem:[#allocation2] sm:$0xff]
    %v66 = vld [vmem:[#allocation2 + $0x8] sm:$0xff]
    %v67 = vld [vmem:[#allocation5] sm:$0xff]
    %v68 = vld [vmem:[#allocation5 + $0x8] sm:$0xff]
    %v69 = vlog2.pop %v65
    %v70 = vmul.f32 %v69, 0.6931472
    %v71 = vlog2.pop %v66
    %v72 = vmul.f32 %v71, 0.6931472
    %v73 = vmax.f32 %v70, -100.0
    %v74 = vmax.f32 %v72, -100.0
    %v75 = vsub.f32 1.0, %v65
    %v76 = vsub.f32 1.0, %v66
    %v77 = vlog2.pop %v75
    %v78 = vmul.f32 %v77, 0.6931472
    %v79 = vlog2.pop %v76
    %v80 = vmul.f32 %v79, 0.6931472
    %v81 = vmax.f32 %v78, -100.0
    %v82 = vmax.f32 %v80, -100.0
    %v83 = vsub.f32 %v73, %v81
    %v84 = vsub.f32 %v74, %v82
    %v85 = vmul.f32 %v67, %v83
    %v86 = vmul.f32 %v68, %v84
    %v87 = vadd.f32 %v85, %v81
    %v88 = vadd.f32 %v86, %v82
    %v89 = vld [vmem:[#allocation7] sm:$0xff]
    %v90 = vadd.f32 %v87, %v88
    %v91 = vadd.f32 %v89, %v90
    %92 = vst [vmem:[#allocation7] sm:$0xff] %v91
    // Predicated region
    $region22: #{tpu_custom_call.1} parent=1 // pred_check
      _
    $region23: #{tpu_custom_call.1} parent=1 // pred_check_branch
      %94 = sbr.rel (0) target = $region25
    $region24: #{tpu_custom_call.1} parent=1 // pred_region
      %s96 = ssub.s32 128, 128
      %97 = vsyncadd [#allocation4], %s96
      %s99 = sshll.u32 [#allocation7], 4
      %s100 = int_to_ptr.vmem [resolvable:$true] %s99
      %102 = dma.vmem_to_hbm [thread:$0]  %s100, 128, %s2, [#allocation4]
    $region25: #{tpu_custom_call.1} parent=1 // pred_fallthru
      _
    // Predicated region
    $region26: #{tpu_custom_call.1} parent=1 // pred_check
      _
    $region27: #{tpu_custom_call.1} parent=1 // pred_check_branch
      %104 = sbr.rel (0) target = $region29
    $region28: #{tpu_custom_call.1} parent=1 // pred_region
      %105 = dma.done [#allocation4], 128
    $region29: #{tpu_custom_call.1} parent=1 // pred_fallthru
      _
    %106 = vsyncpa [#allocation3], 1
    %107 = vsyncpa [#allocation6], 1
    %108 = vsyncpa [#allocation4], 1

</llo_original>
